<compile_context>
chip_gen: v7x
topology: tpu7x:2x2x1
jax: 0.10.0
libtpu: 0.0.40
codegen_flags: <defaults>
</compile_context>

<pallas_src>
import math

import jax
import jax.numpy as jnp
from jax import lax
from jax.experimental import pallas as pl
from jax.experimental.pallas import tpu as pltpu

# ---------------------------------------------------------------------------
# Problem sizes (small, consistent with the module's shape conventions)
# ---------------------------------------------------------------------------
B = 2                   # true batch size
TA = 8                  # horizon_steps
DA = 4                  # action_dim
DACT = TA * DA          # flattened action dim               = 32
TO, DO = 1, 16          # cond['state']: (B, To, Do)
DCOND = TO * DO         #                                     = 16
TEMB = 32               # sinusoidal time-embedding width
TEMB_HALF = TEMB // 2
HID = 128               # MLP hidden width
DENOISING_STEPS = 100

# ---------------------------------------------------------------------------
# Padded / fused layouts
# ---------------------------------------------------------------------------
B_PAD = 8               # pad batch to a full sublane group (f32 vreg = 8 x 128)
F_PAD = 128             # lane-dense feature width of every activation tile

# fused layer-1 input layout (one 128-wide lane vector per example)
X_OFF = 0                            # cols [ 0, 32): x_noisy
TEMB_OFF = DACT                      # cols [32, 64): sinusoidal time embedding
COND_OFF = TEMB_OFF + TEMB           # cols [64, 80): flattened obs state
ONE_COL = COND_OFF + DCOND           # col   80     : constant 1 (folds b1 into W1)
C1_COL = ONE_COL + 1                 # col   81     : sqrt(abar_t)       (W1 row is 0)
C2_COL = ONE_COL + 2                 # col   82     : sqrt(1 - abar_t)   (W1 row is 0)

# packed parameter slab (single bf16 VMEM input -> one DMA; 16-aligned row offsets)
W1_ROW = 0                           # rows [  0,128): W1 (fused input -> HID), row 80 = b1
W2_ROW = 128                         # rows [128,256): W2 (HID -> HID)
B2_ROW = 256                         # row   256     : b2
W3_ROW = 272                         # rows [272,400): W3 (HID -> DACT, lane-padded to 128)
B3_ROW = 400                         # row   400     : b3 (lane-padded to 128)
SLAB_ROWS = 416


# ---------------------------------------------------------------------------
# Setup-time constants (computed once, like the DDPM schedule buffers)
# ---------------------------------------------------------------------------
def cosine_beta_schedule(timesteps, s=0.008):
    steps = timesteps + 1
    x = jnp.linspace(0.0, float(steps), steps)
    alphas_cumprod = jnp.cos(((x / steps) + s) / (1 + s) * jnp.pi * 0.5) ** 2
    alphas_cumprod = alphas_cumprod / alphas_cumprod[0]
    betas = 1.0 - (alphas_cumprod[1:] / alphas_cumprod[:-1])
    return jnp.clip(betas, 0.0, 0.999).astype(jnp.float32)


def make_schedule_table(denoising_steps):
    """(2, T) f32: row 0 = sqrt(abar_t), row 1 = sqrt(1 - abar_t)."""
    betas = cosine_beta_schedule(denoising_steps)
    abar = jnp.cumprod(1.0 - betas, axis=0)
    return jnp.stack([jnp.sqrt(abar), jnp.sqrt(1.0 - abar)]).astype(jnp.float32)


def make_time_embedding_table(denoising_steps):
    """(T, 1, F_PAD) f32 VMEM table.

    Row t holds: sinusoidal time embedding at its fused layer-1 lanes [32,64),
    the constant-1 bias column (col 80), and the q_sample coefficients
    sqrt(abar_t) / sqrt(1-abar_t) at cols 81 / 82.  One gather per example
    supplies everything t-dependent; no per-step sin/cos/gather in the wrapper.
    """
    sched = make_schedule_table(denoising_steps)
    t = jnp.arange(denoising_steps, dtype=jnp.float32)[:, None]
    freqs = jnp.exp(jnp.arange(TEMB_HALF, dtype=jnp.float32)
                    * (-math.log(10000.0) / (TEMB_HALF - 1)))[None, :]
    ang = t * freqs
    tab = jnp.zeros((denoising_steps, F_PAD), jnp.float32)
    tab = tab.at[:, TEMB_OFF:TEMB_OFF + TEMB_HALF].set(jnp.sin(ang))
    tab = tab.at[:, TEMB_OFF + TEMB_HALF:TEMB_OFF + TEMB].set(jnp.cos(ang))
    tab = tab.at[:, ONE_COL].set(1.0)
    tab = tab.at[:, C1_COL].set(sched[0])
    tab = tab.at[:, C2_COL].set(sched[1])
    return tab[:, None, :]


def init_params(key):
    ks = jax.random.split(key, 5)

    def lin(k, fan_in, fan_out):
        return jax.random.normal(k, (fan_in, fan_out), jnp.float32) / math.sqrt(fan_in)

    fan_in1 = DACT + TEMB + DCOND
    return {
        "w1x": lin(ks[0], DACT, HID) * math.sqrt(DACT / fan_in1),
        "w1t": lin(ks[1], TEMB, HID) * math.sqrt(TEMB / fan_in1),
        "w1c": lin(ks[2], DCOND, HID) * math.sqrt(DCOND / fan_in1),
        "b1": jnp.zeros((HID,), jnp.float32),
        "w2": lin(ks[3], HID, HID),
        "b2": jnp.zeros((HID,), jnp.float32),
        "w3": lin(ks[4], HID, DACT),
        "b3": jnp.zeros((DACT,), jnp.float32),
    }


def pack_param_slab(params):
    """Pack all weights/biases into one (SLAB_ROWS, 128) bf16 slab (single DMA)."""
    slab = jnp.zeros((SLAB_ROWS, F_PAD), jnp.float32)
    slab = slab.at[X_OFF:X_OFF + DACT, :].set(params["w1x"])
    slab = slab.at[TEMB_OFF:TEMB_OFF + TEMB, :].set(params["w1t"])
    slab = slab.at[COND_OFF:COND_OFF + DCOND, :].set(params["w1c"])
    slab = slab.at[ONE_COL, :].set(params["b1"])          # b1 folded via ONE_COL of input
    slab = slab.at[W2_ROW:W2_ROW + HID, :].set(params["w2"])
    slab = slab.at[B2_ROW, :].set(params["b2"])
    slab = slab.at[W3_ROW:W3_ROW + HID, :DACT].set(params["w3"])
    slab = slab.at[B3_ROW, :DACT].set(params["b3"])
    return slab.astype(jnp.bfloat16)


# ---------------------------------------------------------------------------
# Pallas kernel: q_sample + time-embedding lookup + MLP + masked MSE, fused.
# ---------------------------------------------------------------------------
def _mish(x):
    return x * jnp.tanh(jax.nn.softplus(x))


def _diffusion_loss_kernel(t_ref, temb_ref, stk_ref, slab_ref, loss_ref):
    # One in-kernel gather per example supplies temb + sqrt(abar_t) + sqrt(1-abar_t)
    # + the constant-1 bias lane.  Padded batch rows stay zero (masked below).
    row = lax.broadcasted_iota(jnp.int32, (B_PAD, 1), 0)
    temb = jnp.zeros((B_PAD, F_PAD), jnp.float32)
    for i in range(B):                               # static unroll over true batch
        ti = t_ref[i]                                # SMEM scalar read
        temb = jnp.where(row == i, temb_ref[ti], temb)

    x0 = stk_ref[0]                                  # (B_PAD, 128) f32, lanes [0,32)
    eps = stk_ref[1]                                 # (B_PAD, 128) f32, lanes [0,32)
    cond = stk_ref[2]                                # (B_PAD, 128) f32, lanes [64,80)
    c1 = temb[:, C1_COL:C1_COL + 1]                  # sqrt(abar_t)        (B_PAD, 1)
    c2 = temb[:, C2_COL:C2_COL + 1]                  # sqrt(1 - abar_t)    (B_PAD, 1)

    # q_sample + fused layer-1 input  [x_noisy | temb | cond | 1 | c1 c2 | 0-pad]:
    # every addend lives in disjoint lanes; lanes 81/82 hit zero rows of W1.
    aug = c1 * x0 + c2 * eps + temb + cond

    # 3-layer Mish MLP; bf16 x bf16 -> f32 MXU matmuls on static slab slices.
    h = _mish(jnp.dot(aug.astype(jnp.bfloat16), slab_ref[pl.ds(W1_ROW, HID), :],
                      preferred_element_type=jnp.float32))            # b1 folded in
    h = _mish(jnp.dot(h.astype(jnp.bfloat16), slab_ref[pl.ds(W2_ROW, HID), :],
                      preferred_element_type=jnp.float32)
              + slab_ref[pl.ds(B2_ROW, 1), :].astype(jnp.float32))
    recon = (jnp.dot(h.astype(jnp.bfloat16), slab_ref[pl.ds(W3_ROW, HID), :],
                     preferred_element_type=jnp.float32)
             + slab_ref[pl.ds(B3_ROW, 1), :].astype(jnp.float32))      # (B_PAD, 128)

    # F.mse_loss(recon, eps, reduction='mean'): padded lanes are exactly zero on
    # both sides; mask padded batch rows and divide by the true element count.
    diff = recon - eps
    sq = jnp.where(row < B, diff * diff, 0.0)
    loss_ref[0, 0] = jnp.sum(sq) * (1.0 / (B * DACT))


@jax.jit
def diffusion_forward_loss(x_start, cond_state, t, noise, slab, temb_tab):
    """Equivalent of DiffusionModel.p_losses with predict_epsilon=True."""
    b = x_start.shape[0]
    assert b == B, "kernel is specialized to the module batch size"

    # Single stacked activation input (one wrapper scatter, one DMA):
    #   slab 0 = x0, slab 1 = eps (both at lanes [0,32)), slab 2 = cond (lanes [64,80)).
    stk = jnp.zeros((3, B_PAD, F_PAD), jnp.float32)
    stk = stk.at[0, :b, :DACT].set(x_start.reshape(b, DACT).astype(jnp.float32))
    stk = stk.at[1, :b, :DACT].set(noise.reshape(b, DACT).astype(jnp.float32))
    stk = stk.at[2, :b, COND_OFF:COND_OFF + DCOND].set(
        cond_state.reshape(b, DCOND).astype(jnp.float32))
    t_pad = jnp.zeros((B_PAD,), jnp.int32).at[:b].set(t.astype(jnp.int32))

    smem = pl.BlockSpec(memory_space=pltpu.MemorySpace.SMEM)
    vmem = pl.BlockSpec(memory_space=pltpu.MemorySpace.VMEM)
    loss = pl.pallas_call(
        _diffusion_loss_kernel,
        out_shape=jax.ShapeDtypeStruct((1, 1), jnp.float32),
        in_specs=[smem, vmem, vmem, vmem],
        out_specs=pl.BlockSpec(memory_space=pltpu.MemorySpace.SMEM),
    )(t_pad, temb_tab, stk, slab)
    return loss[0, 0]


# ---------------------------------------------------------------------------
# Pure-JAX references for correctness checks
# ---------------------------------------------------------------------------
def _sinusoidal_time_emb(t, dim):
    half = dim // 2
    freqs = jnp.exp(jnp.arange(half, dtype=jnp.float32)
                    * (-math.log(10000.0) / (half - 1)))
    ang = t.astype(jnp.float32)[:, None] * freqs[None, :]
    return jnp.concatenate([jnp.sin(ang), jnp.cos(ang)], axis=-1)


def _bdot(a, w):
    return jnp.dot(a.astype(jnp.bfloat16), w.astype(jnp.bfloat16),
                   preferred_element_type=jnp.float32)


def reference_loss_bf16(x_start, cond_state, t, noise, params, sched_tab):
    """Mimics the kernel's bf16-weight / f32-accumulate MXU path (tight parity)."""
    x0 = x_start.reshape(B, DACT).astype(jnp.float32)
    eps = noise.reshape(B, DACT).astype(jnp.float32)
    cond = cond_state.reshape(B, DCOND).astype(jnp.float32)
    c1 = sched_tab[0][t][:, None]
    c2 = sched_tab[1][t][:, None]
    x_noisy = c1 * x0 + c2 * eps
    temb = _sinusoidal_time_emb(t, TEMB)
    q = lambda a: a.astype(jnp.bfloat16).astype(jnp.float32)
    h = _mish(_bdot(x_noisy, params["w1x"]) + _bdot(temb, params["w1t"])
              + _bdot(cond, params["w1c"]) + q(params["b1"]))
    h = _mish(_bdot(h, params["w2"]) + q(params["b2"]))
    recon = _bdot(h, params["w3"]) + q(params["b3"])
    return jnp.mean((recon - eps) ** 2)


def reference_loss_f32(x_start, cond_state, t, noise, params, sched_tab):
    """Full-f32 semantic reference (loose tolerance vs bf16 kernel weights)."""
    x0 = x_start.reshape(B, DACT).astype(jnp.float32)
    eps = noise.reshape(B, DACT).astype(jnp.float32)
    cond = cond_state.reshape(B, DCOND).astype(jnp.float32)
    c1 = sched_tab[0][t][:, None]
    c2 = sched_tab[1][t][:, None]
    x_noisy = c1 * x0 + c2 * eps
    temb = _sinusoidal_time_emb(t, TEMB)
    h = _mish(x_noisy @ params["w1x"] + temb @ params["w1t"]
              + cond @ params["w1c"] + params["b1"])
    h = _mish(h @ params["w2"] + params["b2"])
    recon = h @ params["w3"] + params["b3"]
    return jnp.mean((recon - eps) ** 2)


if __name__ == "__main__":
    key = jax.random.PRNGKey(0)
    k_param, k_x, k_cond, k_t, k_noise = jax.random.split(key, 5)

    params = init_params(k_param)
    slab = pack_param_slab(params)
    sched_tab = make_schedule_table(DENOISING_STEPS)
    temb_tab = make_time_embedding_table(DENOISING_STEPS)

    # forward() inputs: x_start (B, Ta, Da); cond['state'] (B, To, Do)
    x_start = jax.random.normal(k_x, (B, TA, DA), jnp.float32)
    cond_state = jax.random.normal(k_cond, (B, TO, DO), jnp.float32)
    # t ~ randint(0, denoising_steps, (B,)), eps ~ randn_like(x_start)
    t = jax.random.randint(k_t, (B,), 0, DENOISING_STEPS)
    noise = jax.random.normal(k_noise, (B, TA, DA), jnp.float32)

    loss = diffusion_forward_loss(x_start, cond_state, t, noise, slab, temb_tab)
    jax.block_until_ready(loss)

    ref_bf16 = reference_loss_bf16(x_start, cond_state, t, noise, params, sched_tab)
    with jax.default_matmul_precision("highest"):
        ref_f32 = reference_loss_f32(x_start, cond_state, t, noise, params, sched_tab)

    assert loss.shape == () and jnp.isfinite(loss)
    assert jnp.allclose(loss, ref_bf16, rtol=2e-3, atol=1e-5), (loss, ref_bf16)
    assert jnp.allclose(loss, ref_f32, rtol=5e-2, atol=1e-4), (loss, ref_f32)
    print("KERNEL_OK")
</pallas_src>

<mosaic_0001>
module attributes {stable_mosaic.version = 11 : i64} {
  func.func @_diffusion_loss_kernel(%arg0: memref<8xi32, #tpu.memory_space<smem>>, %arg1: memref<100x1x128xf32, #tpu.memory_space<vmem>>, %arg2: memref<3x8x128xf32, #tpu.memory_space<vmem>>, %arg3: memref<416x128xbf16, #tpu.memory_space<vmem>>, %arg4: memref<1x1xf32, #tpu.memory_space<smem>>) attributes {dimension_semantics = [], scalar_prefetch = 0 : i64, scratch_operands = 0 : i64, tpu.core_type = #tpu.core_type<tc>} {
    %0 = tpu.iota {dimensions = array<i32: 0>} : vector<8x1xi32>
    %cst = arith.constant 0.000000e+00 : f32
    %1 = vector.broadcast %cst : f32 to vector<8x128xf32>
    %c0 = arith.constant 0 : index
    %2 = memref.load %arg0[%c0] : memref<8xi32, #tpu.memory_space<smem>>
    %c0_i32 = arith.constant 0 : i32
    %3 = vector.broadcast %c0_i32 : i32 to vector<8x1xi32>
    %4 = arith.cmpi eq, %0, %3 : vector<8x1xi32>
    %5 = arith.index_cast %2 : i32 to index
    %c0_0 = arith.constant 0 : index
    %c0_1 = arith.constant 0 : index
    %6 = vector.load %arg1[%5, %c0_0, %c0_1] : memref<100x1x128xf32, #tpu.memory_space<vmem>>, vector<1x1x128xf32>
    %7 = vector.shape_cast %6 : vector<1x1x128xf32> to vector<1x128xf32>
    %8 = vector.shape_cast %4 : vector<8x1xi1> to vector<8x1xi1>
    %9 = vector.broadcast %8 : vector<8x1xi1> to vector<8x128xi1>
    %10 = vector.shape_cast %7 : vector<1x128xf32> to vector<1x128xf32>
    %11 = vector.broadcast %10 : vector<1x128xf32> to vector<8x128xf32>
    %12 = arith.select %9, %11, %1 : vector<8x128xi1>, vector<8x128xf32>
    %c1 = arith.constant 1 : index
    %13 = memref.load %arg0[%c1] : memref<8xi32, #tpu.memory_space<smem>>
    %c1_i32 = arith.constant 1 : i32
    %14 = vector.broadcast %c1_i32 : i32 to vector<8x1xi32>
    %15 = arith.cmpi eq, %0, %14 : vector<8x1xi32>
    %16 = arith.index_cast %13 : i32 to index
    %c0_2 = arith.constant 0 : index
    %c0_3 = arith.constant 0 : index
    %17 = vector.load %arg1[%16, %c0_2, %c0_3] : memref<100x1x128xf32, #tpu.memory_space<vmem>>, vector<1x1x128xf32>
    %18 = vector.shape_cast %17 : vector<1x1x128xf32> to vector<1x128xf32>
    %19 = vector.shape_cast %15 : vector<8x1xi1> to vector<8x1xi1>
    %20 = vector.broadcast %19 : vector<8x1xi1> to vector<8x128xi1>
    %21 = vector.shape_cast %18 : vector<1x128xf32> to vector<1x128xf32>
    %22 = vector.broadcast %21 : vector<1x128xf32> to vector<8x128xf32>
    %23 = arith.select %20, %22, %12 : vector<8x128xi1>, vector<8x128xf32>
    %c0_4 = arith.constant 0 : index
    %c0_5 = arith.constant 0 : index
    %c0_6 = arith.constant 0 : index
    %24 = vector.load %arg2[%c0_4, %c0_5, %c0_6] : memref<3x8x128xf32, #tpu.memory_space<vmem>>, vector<1x8x128xf32>
    %25 = vector.shape_cast %24 : vector<1x8x128xf32> to vector<8x128xf32>
    %c1_7 = arith.constant 1 : index
    %c0_8 = arith.constant 0 : index
    %c0_9 = arith.constant 0 : index
    %26 = vector.load %arg2[%c1_7, %c0_8, %c0_9] : memref<3x8x128xf32, #tpu.memory_space<vmem>>, vector<1x8x128xf32>
    %27 = vector.shape_cast %26 : vector<1x8x128xf32> to vector<8x128xf32>
    %c2 = arith.constant 2 : index
    %c0_10 = arith.constant 0 : index
    %c0_11 = arith.constant 0 : index
    %28 = vector.load %arg2[%c2, %c0_10, %c0_11] : memref<3x8x128xf32, #tpu.memory_space<vmem>>, vector<1x8x128xf32>
    %29 = vector.shape_cast %28 : vector<1x8x128xf32> to vector<8x128xf32>
    %30 = vector.extract_strided_slice %23 {offsets = [0, 81], sizes = [8, 1], strides = [1, 1]} : vector<8x128xf32> to vector<8x1xf32>
    %31 = vector.extract_strided_slice %23 {offsets = [0, 82], sizes = [8, 1], strides = [1, 1]} : vector<8x128xf32> to vector<8x1xf32>
    %32 = vector.broadcast %30 : vector<8x1xf32> to vector<8x128xf32>
    %33 = arith.mulf %32, %25 : vector<8x128xf32>
    %34 = vector.broadcast %31 : vector<8x1xf32> to vector<8x128xf32>
    %35 = arith.mulf %34, %27 : vector<8x128xf32>
    %36 = arith.addf %33, %35 : vector<8x128xf32>
    %37 = arith.addf %36, %23 : vector<8x128xf32>
    %38 = arith.addf %37, %29 : vector<8x128xf32>
    %39 = arith.truncf %38 : vector<8x128xf32> to vector<8x128xbf16>
    %c0_12 = arith.constant 0 : index
    %c0_13 = arith.constant 0 : index
    %40 = vector.load %arg3[%c0_12, %c0_13] : memref<416x128xbf16, #tpu.memory_space<vmem>>, vector<128x128xbf16>
    %cst_14 = arith.constant dense<0.000000e+00> : vector<8x128xf32>
    %41 = tpu.matmul %39, %40, %cst_14 {dimension_numbers = #tpu.dot_dimension_numbers<[1], [0], [0], [1], [0, 0, 1, 1], [], []>} : vector<8x128xbf16>, vector<128x128xbf16>, vector<8x128xf32> -> vector<8x128xf32>
    %cst_15 = arith.constant 0.000000e+00 : f32
    %42 = vector.broadcast %cst_15 : f32 to vector<8x128xf32>
    %43 = arith.maximumf %41, %42 : vector<8x128xf32>
    %44 = vector.broadcast %cst_15 : f32 to vector<8x128xf32>
    %45 = arith.subf %41, %44 : vector<8x128xf32>
    %46 = arith.cmpf one, %45, %45 : vector<8x128xf32>
    %47 = vector.broadcast %cst_15 : f32 to vector<8x128xf32>
    %48 = arith.addf %41, %47 : vector<8x128xf32>
    %49 = math.absf %45 : vector<8x128xf32>
    %cst_16 = arith.constant 0.000000e+00 : f32
    %50 = vector.broadcast %cst_16 : f32 to vector<8x128xf32>
    %51 = arith.subf %50, %49 : vector<8x128xf32>
    %52 = math.exp %51 : vector<8x128xf32>
    %53 = math.log1p %52 : vector<8x128xf32>
    %54 = arith.addf %43, %53 : vector<8x128xf32>
    %55 = arith.select %46, %48, %54 : vector<8x128xi1>, vector<8x128xf32>
    %56 = math.tanh %55 : vector<8x128xf32>
    %57 = arith.mulf %41, %56 : vector<8x128xf32>
    %58 = arith.truncf %57 : vector<8x128xf32> to vector<8x128xbf16>
    %c128 = arith.constant 128 : index
    %c0_17 = arith.constant 0 : index
    %59 = vector.load %arg3[%c128, %c0_17] : memref<416x128xbf16, #tpu.memory_space<vmem>>, vector<128x128xbf16>
    %cst_18 = arith.constant dense<0.000000e+00> : vector<8x128xf32>
    %60 = tpu.matmul %58, %59, %cst_18 {dimension_numbers = #tpu.dot_dimension_numbers<[1], [0], [0], [1], [0, 0, 1, 1], [], []>} : vector<8x128xbf16>, vector<128x128xbf16>, vector<8x128xf32> -> vector<8x128xf32>
    %c256 = arith.constant 256 : index
    %c0_19 = arith.constant 0 : index
    %61 = vector.load %arg3[%c256, %c0_19] : memref<416x128xbf16, #tpu.memory_space<vmem>>, vector<1x128xbf16>
    %62 = arith.extf %61 : vector<1x128xbf16> to vector<1x128xf32>
    %63 = vector.broadcast %62 : vector<1x128xf32> to vector<8x128xf32>
    %64 = arith.addf %60, %63 : vector<8x128xf32>
    %cst_20 = arith.constant 0.000000e+00 : f32
    %65 = vector.broadcast %cst_20 : f32 to vector<8x128xf32>
    %66 = arith.maximumf %64, %65 : vector<8x128xf32>
    %67 = vector.broadcast %cst_20 : f32 to vector<8x128xf32>
    %68 = arith.subf %64, %67 : vector<8x128xf32>
    %69 = arith.cmpf one, %68, %68 : vector<8x128xf32>
    %70 = vector.broadcast %cst_20 : f32 to vector<8x128xf32>
    %71 = arith.addf %64, %70 : vector<8x128xf32>
    %72 = math.absf %68 : vector<8x128xf32>
    %cst_21 = arith.constant 0.000000e+00 : f32
    %73 = vector.broadcast %cst_21 : f32 to vector<8x128xf32>
    %74 = arith.subf %73, %72 : vector<8x128xf32>
    %75 = math.exp %74 : vector<8x128xf32>
    %76 = math.log1p %75 : vector<8x128xf32>
    %77 = arith.addf %66, %76 : vector<8x128xf32>
    %78 = arith.select %69, %71, %77 : vector<8x128xi1>, vector<8x128xf32>
    %79 = math.tanh %78 : vector<8x128xf32>
    %80 = arith.mulf %64, %79 : vector<8x128xf32>
    %81 = arith.truncf %80 : vector<8x128xf32> to vector<8x128xbf16>
    %c272 = arith.constant 272 : index
    %c0_22 = arith.constant 0 : index
    %82 = vector.load %arg3[%c272, %c0_22] : memref<416x128xbf16, #tpu.memory_space<vmem>>, vector<128x128xbf16>
    %cst_23 = arith.constant dense<0.000000e+00> : vector<8x128xf32>
    %83 = tpu.matmul %81, %82, %cst_23 {dimension_numbers = #tpu.dot_dimension_numbers<[1], [0], [0], [1], [0, 0, 1, 1], [], []>} : vector<8x128xbf16>, vector<128x128xbf16>, vector<8x128xf32> -> vector<8x128xf32>
    %c400 = arith.constant 400 : index
    %c0_24 = arith.constant 0 : index
    %84 = vector.load %arg3[%c400, %c0_24] : memref<416x128xbf16, #tpu.memory_space<vmem>>, vector<1x128xbf16>
    %85 = arith.extf %84 : vector<1x128xbf16> to vector<1x128xf32>
    %86 = vector.broadcast %85 : vector<1x128xf32> to vector<8x128xf32>
    %87 = arith.addf %83, %86 : vector<8x128xf32>
    %88 = arith.subf %87, %27 : vector<8x128xf32>
    %c2_i32 = arith.constant 2 : i32
    %89 = vector.broadcast %c2_i32 : i32 to vector<8x1xi32>
    %90 = arith.cmpi slt, %0, %89 : vector<8x1xi32>
    %91 = arith.mulf %88, %88 : vector<8x128xf32>
    %cst_25 = arith.constant 0.000000e+00 : f32
    %92 = vector.shape_cast %90 : vector<8x1xi1> to vector<8x1xi1>
    %93 = vector.broadcast %92 : vector<8x1xi1> to vector<8x128xi1>
    %94 = vector.broadcast %cst_25 : f32 to vector<8x128xf32>
    %95 = arith.select %93, %91, %94 : vector<8x128xi1>, vector<8x128xf32>
    %96 = vector.shape_cast %95 : vector<8x128xf32> to vector<1x8x128xf32>
    %cst_26 = arith.constant dense<0.000000e+00> : vector<1xf32>
    %97 = vector.multi_reduction <add>, %96, %cst_26 [1, 2] : vector<1x8x128xf32> to vector<1xf32>
    %98 = vector.shape_cast %97 : vector<1xf32> to vector<1x1x1xf32>
    %99 = vector.extract %98[0, 0, 0] : f32 from vector<1x1x1xf32>
    %cst_27 = arith.constant 1.562500e-02 : f32
    %100 = arith.mulf %99, %cst_27 : f32
    %c0_28 = arith.constant 0 : index
    %c0_29 = arith.constant 0 : index
    %101 = memref.load %arg4[%c0_28, %c0_29] : memref<1x1xf32, #tpu.memory_space<smem>>
    memref.store %100, %arg4[%c0_28, %c0_29] : memref<1x1xf32, #tpu.memory_space<smem>>
    return
  }
}

</mosaic_0001>

<llo_original>
// kernel: diffusion_forward_loss.1
$region0: #{diffusion_forward_loss.1}
  #allocation0 [shape = 'u32[]', space=smem, size = 0x4, offset = 0x4, fixed_abs, tag = 'smem constant byte address 0x4 - core index']
  #allocation1 [shape = 'u32[144,128]{1,0:T(1,128)}', space=vmem, size = 0x12000, scoped, tag = 'internal scratch']
  %s0 = inlined_call_operand.vmem [shape: s32[8], index: 0, kind: input, shape index: {}]
  %s1 = inlined_call_operand.vmem [shape: f32[100,1,128], index: 1, kind: input, shape index: {}]
  %s2 = inlined_call_operand.vmem [shape: f32[3,8,128], index: 2, kind: input, shape index: {}]
  %s3 = inlined_call_operand.hbm [shape: bf16[416,128], index: 3, kind: input, shape index: {}]
  %s4 = inlined_call_operand.hbm [shape: f32[1,1], index: 4, kind: output, shape index: {}]
  %s5 = sld [smem:[#allocation0]]
  $region34: #{diffusion_forward_loss.1} parent=0
    _
  %s7 = ssub.s32 1, %s5
  %s8 = scalar_select 0, %s7, %s5
  $region1: #{diffusion_forward_loss.1} parent=0
    #allocation2 [shape = 'u8[512]{0}', space=smem, size = 0x200, scoped, tag = 'input window, operand 0, single buffered']
    #allocation3 [shape = 's32[1]{0}', space=sflag, size = 0x4, scoped, tag = 'scoped memory for diffusion_forward_loss.1']
    #allocation4 [shape = 's32[1]{0}', space=sflag, size = 0x4, scoped, tag = 'scoped memory for diffusion_forward_loss.1']
    #allocation5 [shape = 's32[1]{0}', space=sflag, size = 0x4, scoped, tag = 'scoped memory for diffusion_forward_loss.1']
    #allocation6 [shape = 'u8[106496]{0}', space=vmem, size = 0x1a000, scoped, tag = 'input window, operand 3, single buffered']
    #allocation7 [shape = 'u8[512]{0}', space=smem, size = 0x200, scoped, tag = 'output window, operand 0, single buffered']
    %9 = vsyncpa [#allocation5], 0
    %10 = vsyncpa [#allocation3], 0
    %11 = vsyncpa [#allocation4], 0
    // Predicated region
    $region2: #{diffusion_forward_loss.1} parent=1 // pred_check
      _
    $region3: #{diffusion_forward_loss.1} parent=1 // pred_check_branch
      %13 = sbr.rel (0) target = $region5
    $region4: #{diffusion_forward_loss.1} parent=1 // pred_region
      %s15 = ssub.s32 16, 16
      %16 = vsyncadd [#allocation5], %s15
      %s18 = sshll.u32 %s0, 4
      %s19 = int_to_ptr.vmem [resolvable:$true] %s18
      %21 = dma.vmem_to_smem %s19, 16, [#allocation2], [#allocation5]
    $region5: #{diffusion_forward_loss.1} parent=1 // pred_fallthru
      _
    // Predicated region
    $region6: #{diffusion_forward_loss.1} parent=1 // pred_check
      _
    $region7: #{diffusion_forward_loss.1} parent=1 // pred_check_branch
      %23 = sbr.rel (0) target = $region9
    $region8: #{diffusion_forward_loss.1} parent=1 // pred_region
      _
    $region9: #{diffusion_forward_loss.1} parent=1 // pred_fallthru
      _
    // Predicated region
    $region10: #{diffusion_forward_loss.1} parent=1 // pred_check
      _
    $region11: #{diffusion_forward_loss.1} parent=1 // pred_check_branch
      %25 = sbr.rel (0) target = $region13
    $region12: #{diffusion_forward_loss.1} parent=1 // pred_region
      _
    $region13: #{diffusion_forward_loss.1} parent=1 // pred_fallthru
      _
    // Predicated region
    $region14: #{diffusion_forward_loss.1} parent=1 // pred_check
      _
    $region15: #{diffusion_forward_loss.1} parent=1 // pred_check_branch
      %27 = sbr.rel (0) target = $region17
    $region16: #{diffusion_forward_loss.1} parent=1 // pred_region
      %s29 = ssub.s32 3328, 3328
      %30 = vsyncadd [#allocation3], %s29
      %s31 = sshll.u32 [#allocation6], 4
      %s32 = int_to_ptr.vmem [resolvable:$true] %s31
      %37 = dma.hbm_to_vmem [thread:$0]  %s3, 3328, %s32, [#allocation3], 64, 64, 4
    $region17: #{diffusion_forward_loss.1} parent=1 // pred_fallthru
      _
    // Predicated region
    $region18: #{diffusion_forward_loss.1} parent=1 // pred_check
      _
    $region19: #{diffusion_forward_loss.1} parent=1 // pred_check_branch
      %39 = sbr.rel (0) target = $region21
    $region20: #{diffusion_forward_loss.1} parent=1 // pred_region
      %40 = dma.done [#allocation5], 16
    $region21: #{diffusion_forward_loss.1} parent=1 // pred_fallthru
      _
    // Predicated region
    $region22: #{diffusion_forward_loss.1} parent=1 // pred_check
      _
    $region23: #{diffusion_forward_loss.1} parent=1 // pred_check_branch
      %42 = sbr.rel (0) target = $region25
    $region24: #{diffusion_forward_loss.1} parent=1 // pred_region
      %43 = dma.done [#allocation3], 3328
    $region25: #{diffusion_forward_loss.1} parent=1 // pred_fallthru
      _
    %44 = sfence
    %v46 = vlaneseq
    %v47 = vshrl.u32 %v46, 7
    %s48 = sld [smem:[#allocation2]]
    %vm49 = vcmp.eq.s32.totalorder %v47, 0
    %s50 = scalar_lea.vmem %s1, %s48
    %v51 = vld [vmem:[%s50] sm:$0x1]
    %v52 = vsel %vm49, 1, 0
    %vm53 = vcmp.eq.s32.totalorder %v52, 1
    %v55 = vlaneseq
    %v56 = vshrl.u32 %v55, 7
    %v57 = vsub.s32 0, %v56
    %v58 = vrot.slane %v51, %v57
    %v60 = vsel %vm53, %v58, 0.0
    %s61 = sld [smem:[#allocation2 + $0x1]]
    %vm62 = vcmp.eq.s32.totalorder %v47, 1
    %s63 = scalar_lea.vmem %s1, %s61
    %v64 = vld [vmem:[%s63] sm:$0x1]
    %v65 = vsel %vm62, 1, 0
    %vm66 = vcmp.eq.s32.totalorder %v65, 1
    %v68 = vlaneseq
    %v69 = vshrl.u32 %v68, 7
    %v70 = vsub.s32 0, %v69
    %v71 = vrot.slane %v64, %v70
    %v73 = vsel %vm66, %v71, %v60
    %v74 = vld [vmem:[%s2] sm:$0xff]
    %s75 = scalar_lea.vmem %s2, 8
    %v76 = vld [vmem:[%s75] sm:$0xff]
    %s77 = scalar_lea.vmem %s2, 16
    %v78 = vld [vmem:[%s77] sm:$0xff]
    %80 = vset.pattern.permute.xlu0 81
    %81 = vperm.xlu0 %80, %v73
    %v82 = vpop.permute.xlu0 %81
    %v84 = vmul.f32 %v82, %v74
    %85 = vset.pattern.permute.xlu0 82
    %86 = vperm.xlu0 %85, %v73
    %v87 = vpop.permute.xlu0 %86
    %v89 = vmul.f32 %v87, %v76
    %v90 = vadd.f32 %v84, %v89
    %v91 = vadd.f32 %v90, %v73
    %v92 = vadd.f32 %v91, %v78
    %v93 = vpack.c.bf16 %v92, %v92
    %v94 = vld [vmem:[#allocation6] sm:$0xf]
    %v95 = vld [vmem:[#allocation6 + $0x4] sm:$0xf]
    %v96 = vld [vmem:[#allocation6 + $0x8] sm:$0xf]
    %v97 = vld [vmem:[#allocation6 + $0xc] sm:$0xf]
    %v98 = vld [vmem:[#allocation6 + $0x10] sm:$0xf]
    %v99 = vld [vmem:[#allocation6 + $0x14] sm:$0xf]
    %v100 = vld [vmem:[#allocation6 + $0x18] sm:$0xf]
    %v101 = vld [vmem:[#allocation6 + $0x1c] sm:$0xf]
    %v102 = vld [vmem:[#allocation6 + $0x20] sm:$0xf]
    %v103 = vld [vmem:[#allocation6 + $0x24] sm:$0xf]
    %v104 = vld [vmem:[#allocation6 + $0x28] sm:$0xf]
    %v105 = vld [vmem:[#allocation6 + $0x2c] sm:$0xf]
    %v106 = vld [vmem:[#allocation6 + $0x30] sm:$0xf]
    %v107 = vld [vmem:[#allocation6 + $0x34] sm:$0xf]
    %v108 = vld [vmem:[#allocation6 + $0x38] sm:$0xf]
    %v109 = vld [vmem:[#allocation6 + $0x3c] sm:$0xf]
    %v126 = vunpack.c.l.b16 %v94
    %v127 = vunpack.c.l.b16 %v95
    %v128 = vunpack.c.l.b16 %v96
    %v129 = vunpack.c.l.b16 %v97
    %v130 = vunpack.c.l.b16 %v98
    %v131 = vunpack.c.l.b16 %v99
    %v132 = vunpack.c.l.b16 %v100
    %v133 = vunpack.c.l.b16 %v101
    %v134 = vunpack.c.l.b16 %v102
    %v135 = vunpack.c.l.b16 %v103
    %v136 = vunpack.c.l.b16 %v104
    %v137 = vunpack.c.l.b16 %v105
    %v138 = vunpack.c.l.b16 %v106
    %v139 = vunpack.c.l.b16 %v107
    %v140 = vunpack.c.l.b16 %v108
    %v141 = vunpack.c.l.b16 %v109
    %v142 = vpack.c.b16 %v127, %v126
    %v143 = vpack.c.b16 %v129, %v128
    %v144 = vpack.c.b16 %v131, %v130
    %v145 = vpack.c.b16 %v133, %v132
    %v146 = vpack.c.b16 %v135, %v134
    %v147 = vpack.c.b16 %v137, %v136
    %v148 = vpack.c.b16 %v139, %v138
    %v149 = vpack.c.b16 %v141, %v140
    %158 = vmatprep.subr.bf16.mxu0 0
    %159 = vmatpush1.bf16.msra.mxu0 %v142
    %160 = vmatprep.subr.bf16.mxu0 0
    %161 = vmatpush1.bf16.msra.mxu0 %v143
    %162 = vmatprep.subr.bf16.mxu0 0
    %163 = vmatpush1.bf16.msra.mxu0 %v144
    %164 = vmatprep.subr.bf16.mxu0 0
    %165 = vmatpush1.bf16.msra.mxu0 %v145
    %166 = vmatprep.subr.bf16.mxu0 0
    %167 = vmatpush1.bf16.msra.mxu0 %v146
    %168 = vmatprep.subr.bf16.mxu0 0
    %169 = vmatpush1.bf16.msra.mxu0 %v147
    %170 = vmatprep.subr.bf16.mxu0 0
    %171 = vmatpush1.bf16.msra.mxu0 %v148
    %172 = vmatprep.subr.bf16.mxu0 0
    %173 = vmatpush1.bf16.msra.mxu0 %v149
    %174 = vmatprep.subr.bf16.mxu0 0
    %175 = vmatpush1.bf16.msra.mxu0 0
    %176 = vmatprep.subr.bf16.mxu0 0
    %177 = vmatpush1.bf16.msra.mxu0 0
    %178 = vmatprep.subr.bf16.mxu0 0
    %179 = vmatpush1.bf16.msra.mxu0 0
    %180 = vmatprep.subr.bf16.mxu0 0
    %181 = vmatpush1.bf16.msra.mxu0 0
    %182 = vmatprep.subr.bf16.mxu0 0
    %183 = vmatpush1.bf16.msra.mxu0 0
    %184 = vmatprep.subr.bf16.mxu0 0
    %185 = vmatpush1.bf16.msra.mxu0 0
    %186 = vmatprep.subr.bf16.mxu0 0
    %187 = vmatpush1.bf16.msra.mxu0 0
    %188 = vmatprep.subr.bf16.mxu0 0
    %189 = vmatpush1.bf16.msra.mxu0 0
    %190 = vmatprep.mubr.bf16.mxu0 0
    %191 = vmatmul.mubr.bf16.gmra.mrb[0].mxu0 %v93
    %v192 = vpop.f32.mrb[0].mxu0
    %v193 = vadd.f32 0.0, %v192
    %v194 = vpop.f32.mrb[0].mxu0
    %v195 = vpop.f32.mrb[0].mxu0
    %v196 = vpop.f32.mrb[0].mxu0
    %197 = vdwg.mxu0
    %v198 = vmax.f32 %v193, 0.0
    %vm199 = vcmp.ne.f32.partialorder %v193, %v193
    %v200 = vadd.f32 %v193, 0.0
    %v201 = vand.u32 2147483647, %v193
    %v202 = vsub.f32 0.0, %v201
    %v203 = vmul.f32 %v202, 1.442695
    %v204 = vpow.pop %v203
    %v205 = vadd.f32 %v204, 1.0
    %v206 = vlog2.pop %v205
    %v207 = vmul.f32 %v206, 0.6931472
    %v208 = vmul.f32 -0.5, %v204
    %v209 = vadd.f32 %v208, 1.0
    %v210 = vmul.f32 %v209, %v204
    %v211 = vand.u32 2147483647, %v204
    %vm212 = vcmp.lt.f32.partialorder %v211, 0.0004427343
    %v213 = vsel %vm212, %v210, %v207
    %v214 = vadd.f32 %v198, %v213
    %v215 = vsel %vm199, %v200, %v214
    %v216 = vtanh.pop %v215
    %v217 = vmul.f32 %v193, %v216
    %v218 = vpack.c.bf16 %v217, %v217
    %v219 = vld [vmem:[#allocation6 + $0x40] sm:$0xf]
    %v220 = vld [vmem:[#allocation6 + $0x44] sm:$0xf]
    %v221 = vld [vmem:[#allocation6 + $0x48] sm:$0xf]
    %v222 = vld [vmem:[#allocation6 + $0x4c] sm:$0xf]
    %v223 = vld [vmem:[#allocation6 + $0x50] sm:$0xf]
    %v224 = vld [vmem:[#allocation6 + $0x54] sm:$0xf]
    %v225 = vld [vmem:[#allocation6 + $0x58] sm:$0xf]
    %v226 = vld [vmem:[#allocation6 + $0x5c] sm:$0xf]
    %v227 = vld [vmem:[#allocation6 + $0x60] sm:$0xf]
    %v228 = vld [vmem:[#allocation6 + $0x64] sm:$0xf]
    %v229 = vld [vmem:[#allocation6 + $0x68] sm:$0xf]
    %v230 = vld [vmem:[#allocation6 + $0x6c] sm:$0xf]
    %v231 = vld [vmem:[#allocation6 + $0x70] sm:$0xf]
    %v232 = vld [vmem:[#allocation6 + $0x74] sm:$0xf]
    %v233 = vld [vmem:[#allocation6 + $0x78] sm:$0xf]
    %v234 = vld [vmem:[#allocation6 + $0x7c] sm:$0xf]
    %v235 = vld [vmem:[#allocation6 + $0x80] sm:$0x1]
    %v236 = vunpack.c.l.bf16 %v235
    %v237 = vlaneseq
    %v238 = vshrl.u32 %v237, 7
    %v239 = vsub.s32 0, %v238
    %v240 = vrot.slane %v236, %v239
    %v257 = vunpack.c.l.b16 %v219
    %v258 = vunpack.c.l.b16 %v220
    %v259 = vunpack.c.l.b16 %v221
    %v260 = vunpack.c.l.b16 %v222
    %v261 = vunpack.c.l.b16 %v223
    %v262 = vunpack.c.l.b16 %v224
    %v263 = vunpack.c.l.b16 %v225
    %v264 = vunpack.c.l.b16 %v226
    %v265 = vunpack.c.l.b16 %v227
    %v266 = vunpack.c.l.b16 %v228
    %v267 = vunpack.c.l.b16 %v229
    %v268 = vunpack.c.l.b16 %v230
    %v269 = vunpack.c.l.b16 %v231
    %v270 = vunpack.c.l.b16 %v232
    %v271 = vunpack.c.l.b16 %v233
    %v272 = vunpack.c.l.b16 %v234
    %v273 = vpack.c.b16 %v258, %v257
    %v274 = vpack.c.b16 %v260, %v259
    %v275 = vpack.c.b16 %v262, %v261
    %v276 = vpack.c.b16 %v264, %v263
    %v277 = vpack.c.b16 %v266, %v265
    %v278 = vpack.c.b16 %v268, %v267
    %v279 = vpack.c.b16 %v270, %v269
    %v280 = vpack.c.b16 %v272, %v271
    %289 = vmatprep.subr.bf16.mxu0 0
    %290 = vmatpush1.bf16.msra.mxu0 %v273
    %291 = vmatprep.subr.bf16.mxu0 0
    %292 = vmatpush1.bf16.msra.mxu0 %v274
    %293 = vmatprep.subr.bf16.mxu0 0
    %294 = vmatpush1.bf16.msra.mxu0 %v275
    %295 = vmatprep.subr.bf16.mxu0 0
    %296 = vmatpush1.bf16.msra.mxu0 %v276
    %297 = vmatprep.subr.bf16.mxu0 0
    %298 = vmatpush1.bf16.msra.mxu0 %v277
    %299 = vmatprep.subr.bf16.mxu0 0
    %300 = vmatpush1.bf16.msra.mxu0 %v278
    %301 = vmatprep.subr.bf16.mxu0 0
    %302 = vmatpush1.bf16.msra.mxu0 %v279
    %303 = vmatprep.subr.bf16.mxu0 0
    %304 = vmatpush1.bf16.msra.mxu0 %v280
    %305 = vmatprep.subr.bf16.mxu0 0
    %306 = vmatpush1.bf16.msra.mxu0 0
    %307 = vmatprep.subr.bf16.mxu0 0
    %308 = vmatpush1.bf16.msra.mxu0 0
    %309 = vmatprep.subr.bf16.mxu0 0
    %310 = vmatpush1.bf16.msra.mxu0 0
    %311 = vmatprep.subr.bf16.mxu0 0
    %312 = vmatpush1.bf16.msra.mxu0 0
    %313 = vmatprep.subr.bf16.mxu0 0
    %314 = vmatpush1.bf16.msra.mxu0 0
    %315 = vmatprep.subr.bf16.mxu0 0
    %316 = vmatpush1.bf16.msra.mxu0 0
    %317 = vmatprep.subr.bf16.mxu0 0
    %318 = vmatpush1.bf16.msra.mxu0 0
    %319 = vmatprep.subr.bf16.mxu0 0
    %320 = vmatpush1.bf16.msra.mxu0 0
    %321 = vmatprep.mubr.bf16.mxu0 0
    %322 = vmatmul.mubr.bf16.gmra.mrb[0].mxu0 %v218
    %v323 = vpop.f32.mrb[0].mxu0
    %v324 = vadd.f32 %v240, %v323
    %v325 = vpop.f32.mrb[0].mxu0
    %v326 = vpop.f32.mrb[0].mxu0
    %v327 = vpop.f32.mrb[0].mxu0
    %328 = vdwg.mxu0
    %v329 = vmax.f32 %v324, 0.0
    %vm330 = vcmp.ne.f32.partialorder %v324, %v324
    %v331 = vadd.f32 %v324, 0.0
    %v332 = vand.u32 2147483647, %v324
    %v333 = vsub.f32 0.0, %v332
    %v334 = vmul.f32 %v333, 1.442695
    %v335 = vpow.pop %v334
    %v336 = vadd.f32 %v335, 1.0
    %v337 = vlog2.pop %v336
    %v338 = vmul.f32 %v337, 0.6931472
    %v339 = vmul.f32 -0.5, %v335
    %v340 = vadd.f32 %v339, 1.0
    %v341 = vmul.f32 %v340, %v335
    %v342 = vand.u32 2147483647, %v335
    %vm343 = vcmp.lt.f32.partialorder %v342, 0.0004427343
    %v344 = vsel %vm343, %v341, %v338
    %v345 = vadd.f32 %v329, %v344
    %v346 = vsel %vm330, %v331, %v345
    %v347 = vtanh.pop %v346
    %v348 = vmul.f32 %v324, %v347
    %v349 = vpack.c.bf16 %v348, %v348
    %v350 = vld [vmem:[#allocation6 + $0x88] sm:$0xf]
    %v351 = vld [vmem:[#allocation6 + $0x8c] sm:$0xf]
    %v352 = vld [vmem:[#allocation6 + $0x90] sm:$0xf]
    %v353 = vld [vmem:[#allocation6 + $0x94] sm:$0xf]
    %v354 = vld [vmem:[#allocation6 + $0x98] sm:$0xf]
    %v355 = vld [vmem:[#allocation6 + $0x9c] sm:$0xf]
    %v356 = vld [vmem:[#allocation6 + $0xa0] sm:$0xf]
    %v357 = vld [vmem:[#allocation6 + $0xa4] sm:$0xf]
    %v358 = vld [vmem:[#allocation6 + $0xa8] sm:$0xf]
    %v359 = vld [vmem:[#allocation6 + $0xac] sm:$0xf]
    %v360 = vld [vmem:[#allocation6 + $0xb0] sm:$0xf]
    %v361 = vld [vmem:[#allocation6 + $0xb4] sm:$0xf]
    %v362 = vld [vmem:[#allocation6 + $0xb8] sm:$0xf]
    %v363 = vld [vmem:[#allocation6 + $0xbc] sm:$0xf]
    %v364 = vld [vmem:[#allocation6 + $0xc0] sm:$0xf]
    %v365 = vld [vmem:[#allocation6 + $0xc4] sm:$0xf]
    %v366 = vld [vmem:[#allocation6 + $0xc8] sm:$0x1]
    %v367 = vunpack.c.l.bf16 %v366
    %v368 = vlaneseq
    %v369 = vshrl.u32 %v368, 7
    %v370 = vsub.s32 0, %v369
    %v371 = vrot.slane %v367, %v370
    %v388 = vunpack.c.l.b16 %v350
    %v389 = vunpack.c.l.b16 %v351
    %v390 = vunpack.c.l.b16 %v352
    %v391 = vunpack.c.l.b16 %v353
    %v392 = vunpack.c.l.b16 %v354
    %v393 = vunpack.c.l.b16 %v355
    %v394 = vunpack.c.l.b16 %v356
    %v395 = vunpack.c.l.b16 %v357
    %v396 = vunpack.c.l.b16 %v358
    %v397 = vunpack.c.l.b16 %v359
    %v398 = vunpack.c.l.b16 %v360
    %v399 = vunpack.c.l.b16 %v361
    %v400 = vunpack.c.l.b16 %v362
    %v401 = vunpack.c.l.b16 %v363
    %v402 = vunpack.c.l.b16 %v364
    %v403 = vunpack.c.l.b16 %v365
    %v404 = vpack.c.b16 %v389, %v388
    %v405 = vpack.c.b16 %v391, %v390
    %v406 = vpack.c.b16 %v393, %v392
    %v407 = vpack.c.b16 %v395, %v394
    %v408 = vpack.c.b16 %v397, %v396
    %v409 = vpack.c.b16 %v399, %v398
    %v410 = vpack.c.b16 %v401, %v400
    %v411 = vpack.c.b16 %v403, %v402
    %420 = vmatprep.subr.bf16.mxu0 0
    %421 = vmatpush1.bf16.msra.mxu0 %v404
    %422 = vmatprep.subr.bf16.mxu0 0
    %423 = vmatpush1.bf16.msra.mxu0 %v405
    %424 = vmatprep.subr.bf16.mxu0 0
    %425 = vmatpush1.bf16.msra.mxu0 %v406
    %426 = vmatprep.subr.bf16.mxu0 0
    %427 = vmatpush1.bf16.msra.mxu0 %v407
    %428 = vmatprep.subr.bf16.mxu0 0
    %429 = vmatpush1.bf16.msra.mxu0 %v408
    %430 = vmatprep.subr.bf16.mxu0 0
    %431 = vmatpush1.bf16.msra.mxu0 %v409
    %432 = vmatprep.subr.bf16.mxu0 0
    %433 = vmatpush1.bf16.msra.mxu0 %v410
    %434 = vmatprep.subr.bf16.mxu0 0
    %435 = vmatpush1.bf16.msra.mxu0 %v411
    %436 = vmatprep.subr.bf16.mxu0 0
    %437 = vmatpush1.bf16.msra.mxu0 0
    %438 = vmatprep.subr.bf16.mxu0 0
    %439 = vmatpush1.bf16.msra.mxu0 0
    %440 = vmatprep.subr.bf16.mxu0 0
    %441 = vmatpush1.bf16.msra.mxu0 0
    %442 = vmatprep.subr.bf16.mxu0 0
    %443 = vmatpush1.bf16.msra.mxu0 0
    %444 = vmatprep.subr.bf16.mxu0 0
    %445 = vmatpush1.bf16.msra.mxu0 0
    %446 = vmatprep.subr.bf16.mxu0 0
    %447 = vmatpush1.bf16.msra.mxu0 0
    %448 = vmatprep.subr.bf16.mxu0 0
    %449 = vmatpush1.bf16.msra.mxu0 0
    %450 = vmatprep.subr.bf16.mxu0 0
    %451 = vmatpush1.bf16.msra.mxu0 0
    %452 = vmatprep.mubr.bf16.mxu0 0
    %453 = vmatmul.mubr.bf16.gmra.mrb[0].mxu0 %v349
    %v454 = vpop.f32.mrb[0].mxu0
    %v455 = vadd.f32 %v371, %v454
    %v456 = vpop.f32.mrb[0].mxu0
    %v457 = vpop.f32.mrb[0].mxu0
    %v458 = vpop.f32.mrb[0].mxu0
    %459 = vdwg.mxu0
    %v460 = vsub.f32 %v455, %v76
    %vm461 = vcmp.lt.s32.totalorder %v47, 2
    %v462 = vmul.f32 %v460, %v460
    %v463 = vsel %vm461, 1, 0
    %vm464 = vcmp.eq.s32.totalorder %v463, 1
    %v465 = vsel %vm464, %v462, 0.0
    %466 = vadd.xlane.f32.xlu0 %v465
    %v467 = vpop.xlane.xlu0 %466
    %v468 = vrot.slane %v467, 4
    %v469 = vadd.f32 %v467, %v468
    %v470 = vrot.slane %v469, 2
    %v471 = vadd.f32 %v469, %v470
    %v472 = vrot.slane %v471, 1
    %v473 = vadd.f32 %v471, %v472
    %s474 = vtos %v473
    %s475 = smul.f32 %s474, 0.015625
    %s476 = scalar_lea.smem [#allocation7], 0
    %477 = sst [smem:[%s476]] %s475
    // Predicated region
    $region26: #{diffusion_forward_loss.1} parent=1 // pred_check
      _
    $region27: #{diffusion_forward_loss.1} parent=1 // pred_check_branch
      %479 = sbr.rel (0) target = $region29
    $region28: #{diffusion_forward_loss.1} parent=1 // pred_region
      %s481 = ssub.s32 16, 16
      %482 = vsyncadd [#allocation4], %s481
      %485 = dma.smem_to_hbm [#allocation7], 16, %s4, [#allocation4]
    $region29: #{diffusion_forward_loss.1} parent=1 // pred_fallthru
      _
    // Predicated region
    $region30: #{diffusion_forward_loss.1} parent=1 // pred_check
      _
    $region31: #{diffusion_forward_loss.1} parent=1 // pred_check_branch
      %487 = sbr.rel (0) target = $region33
    $region32: #{diffusion_forward_loss.1} parent=1 // pred_region
      %488 = dma.done [#allocation4], 16
    $region33: #{diffusion_forward_loss.1} parent=1 // pred_fallthru
      _
    %489 = sfence
    %490 = vsyncpa [#allocation3], 1
    %491 = vsyncpa [#allocation4], 1
    %492 = vsyncpa [#allocation5], 1

</llo_original>
